<compile_context>
chip_gen: v5e
topology: v5e:2x2
jax: 0.10.0
libtpu: 0.0.40
codegen_flags: <defaults>
</compile_context>

<pallas_src>
import math

import jax
import jax.numpy as jnp
from jax import lax
from jax.experimental import pallas as pl
from jax.experimental.pallas import tpu as pltpu


def _round_up(x, m):
    return ((x + m - 1) // m) * m


def _noisy_linear_kernel(x_ref, xe_ref, wmu_ref, wsig_ref, eout_ref, b_ref,
                         o_ref, acc_mu, acc_sig):
    """Training tile: out = x@Wmu^T + eps_out ⊙ (xe@Wsig^T) + bias, xe = x⊙eps_in."""
    k = pl.program_id(2)

    @pl.when(k == 0)
    def _():
        acc_mu[...] = jnp.zeros_like(acc_mu)
        acc_sig[...] = jnp.zeros_like(acc_sig)

    # Transpose-free MXU contractions over the shared in_features axis:
    # [tb, tk] . [tn, tk] -> [tb, tn], accumulated in f32.
    acc_mu[...] += lax.dot_general(
        x_ref[...], wmu_ref[...],
        dimension_numbers=(((1,), (1,)), ((), ())),
        preferred_element_type=jnp.float32)
    acc_sig[...] += lax.dot_general(
        xe_ref[...], wsig_ref[...],
        dimension_numbers=(((1,), (1,)), ((), ())),
        preferred_element_type=jnp.float32)

    @pl.when(k == pl.num_programs(2) - 1)
    def _():
        o_ref[...] = (acc_mu[...] + acc_sig[...] * eout_ref[...]
                      + b_ref[...]).astype(o_ref.dtype)


def _mu_linear_kernel(x_ref, wmu_ref, b_ref, o_ref, acc_mu):
    """Eval tile: plain linear with the mu parameters only."""
    k = pl.program_id(2)

    @pl.when(k == 0)
    def _():
        acc_mu[...] = jnp.zeros_like(acc_mu)

    acc_mu[...] += lax.dot_general(
        x_ref[...], wmu_ref[...],
        dimension_numbers=(((1,), (1,)), ((), ())),
        preferred_element_type=jnp.float32)

    @pl.when(k == pl.num_programs(2) - 1)
    def _():
        o_ref[...] = (acc_mu[...] + b_ref[...]).astype(o_ref.dtype)


def prepare_noisy_linear(weight_mu, weight_sigma, bias_mu, bias_sigma,
                         eps_in, eps_out, *, tn=256, tk=512,
                         weight_dtype=jnp.bfloat16):
    """One-time packing of the layer state for the Pallas forward.

    The expensive part — padding + casting the two [out, in] weight matrices —
    happens here ONCE, not per forward call.  Noise-dependent pieces (eps_out
    row, composed bias) are only out_features elements; re-run this after
    `reset_noise()` or a parameter update.
    """
    out_f, in_f = weight_mu.shape
    tn = min(tn, _round_up(out_f, 128))
    tk = min(tk, _round_up(in_f, 128))
    Np = _round_up(out_f, tn)
    Kp = _round_up(in_f, tk)

    pad_w = ((0, Np - out_f), (0, Kp - in_f))
    wmu = jnp.pad(weight_mu, pad_w).astype(weight_dtype)
    wsig = jnp.pad(weight_sigma, pad_w).astype(weight_dtype)

    eps_out_row = jnp.pad(eps_out, (0, Np - out_f)).reshape(1, Np).astype(jnp.float32)
    bias_train = jnp.pad(bias_mu + bias_sigma * eps_out,
                         (0, Np - out_f)).reshape(1, Np).astype(jnp.float32)
    bias_eval = jnp.pad(bias_mu, (0, Np - out_f)).reshape(1, Np).astype(jnp.float32)

    return dict(wmu=wmu, wsig=wsig, eps_in=eps_in.astype(jnp.float32),
                eps_out_row=eps_out_row, bias_train=bias_train,
                bias_eval=bias_eval, out_features=out_f, in_features=in_f,
                Np=Np, Kp=Kp, tn=tn, tk=tk, weight_dtype=weight_dtype)


def noisy_linear(x, prepared, *, training=True, tb=256):
    """Forward pass of NoisyLinear on a prepared layer.  x: [..., in_features]."""
    *lead, in_f = x.shape
    assert in_f == prepared["in_features"]
    out_f = prepared["out_features"]
    x2 = x.reshape(-1, in_f)
    B = x2.shape[0]

    tn, tk = prepared["tn"], prepared["tk"]
    Np, Kp = prepared["Np"], prepared["Kp"]
    wdt = prepared["weight_dtype"]

    # bf16 packs 16 rows per sublane tile -> keep the batch tile a multiple of 16.
    # For large B, raise tb (it amortizes the Wmu/Wsig streams over more rows).
    tb = min(tb, _round_up(B, 16))
    Bp = _round_up(B, tb)

    # v7x has 2 TensorCores per chip: if both "parallel" grid axes would have a
    # single block, split the N tile so the parallel extent is >= 2
    # (near-neutral on single-TC v5e/v6e).
    if Bp // tb == 1 and Np // tn == 1 and tn >= 256:
        tn = tn // 2

    grid = (Bp // tb, Np // tn, Kp // tk)

    # Only x (small) is padded per call; weights were padded once in prepare().
    xp = jnp.pad(x2, ((0, Bp - B), (0, Kp - in_f)))

    x_spec = pl.BlockSpec((tb, tk), lambda i, j, k: (i, k))
    w_spec = pl.BlockSpec((tn, tk), lambda i, j, k: (j, k))
    row_spec = pl.BlockSpec((1, tn), lambda i, j, k: (0, j))
    o_spec = pl.BlockSpec((tb, tn), lambda i, j, k: (i, j))

    compiler_params = pltpu.CompilerParams(
        dimension_semantics=("parallel", "parallel", "arbitrary"))
    out_shape = jax.ShapeDtypeStruct((Bp, Np), x.dtype)
    acc = pltpu.VMEM((tb, tn), jnp.float32)

    if training:
        # Fold the factorized input noise into a second small activation stream:
        # x @ (Wsig * (eps_out ⊗ eps_in))^T == eps_out ⊙ ((x ⊙ eps_in) @ Wsig^T).
        xe = x2 * prepared["eps_in"][None, :].astype(x2.dtype)
        xep = jnp.pad(xe, ((0, Bp - B), (0, Kp - in_f)))
        out = pl.pallas_call(
            _noisy_linear_kernel,
            out_shape=out_shape,
            grid_spec=pltpu.PrefetchScalarGridSpec(
                num_scalar_prefetch=0,
                grid=grid,
                in_specs=[x_spec, x_spec, w_spec, w_spec, row_spec, row_spec],
                out_specs=o_spec,
                scratch_shapes=[acc, acc]),
            compiler_params=compiler_params,
        )(xp.astype(wdt), xep.astype(wdt), prepared["wmu"], prepared["wsig"],
          prepared["eps_out_row"], prepared["bias_train"])
    else:
        out = pl.pallas_call(
            _mu_linear_kernel,
            out_shape=out_shape,
            grid_spec=pltpu.PrefetchScalarGridSpec(
                num_scalar_prefetch=0,
                grid=grid,
                in_specs=[x_spec, w_spec, row_spec],
                out_specs=o_spec,
                scratch_shapes=[acc]),
            compiler_params=compiler_params,
        )(xp.astype(wdt), prepared["wmu"], prepared["bias_eval"])

    return out[:B, :out_f].reshape(*lead, out_f)


def init_noisy_linear_params(key, in_features, out_features, sigma_init=0.017):
    """Deterministic parameter + factorized-noise init mirroring NoisyLinear."""
    k_wmu, k_bmu, k_ein, k_eout = jax.random.split(key, 4)
    mu_range = 1.0 / math.sqrt(in_features)

    weight_mu = jax.random.uniform(
        k_wmu, (out_features, in_features), jnp.float32, -mu_range, mu_range)
    weight_sigma = jnp.full((out_features, in_features), sigma_init, jnp.float32)
    bias_mu = jax.random.uniform(
        k_bmu, (out_features,), jnp.float32, -mu_range, mu_range)
    bias_sigma = jnp.full((out_features,), sigma_init, jnp.float32)

    def scale_noise(k, size):
        v = jax.random.normal(k, (size,), jnp.float32)
        return jnp.sign(v) * jnp.sqrt(jnp.abs(v))

    eps_in = scale_noise(k_ein, in_features)     # factorized noise (eps_out ⊗ eps_in)
    eps_out = scale_noise(k_eout, out_features)

    return dict(weight_mu=weight_mu, weight_sigma=weight_sigma,
                bias_mu=bias_mu, bias_sigma=bias_sigma,
                eps_in=eps_in, eps_out=eps_out)


if __name__ == "__main__":
    key = jax.random.PRNGKey(0)
    k_params, k_x = jax.random.split(key)

    B, in_features, out_features = 8, 32, 16
    params = init_noisy_linear_params(k_params, in_features, out_features)
    x = jax.random.normal(k_x, (B, in_features), jnp.float32)

    # One-time prep: pads + casts the weight matrices (not repeated per call).
    prepared = prepare_noisy_linear(
        params["weight_mu"], params["weight_sigma"],
        params["bias_mu"], params["bias_sigma"],
        params["eps_in"], params["eps_out"])

    out_train = noisy_linear(x, prepared, training=True)
    out_eval = noisy_linear(x, prepared, training=False)
    out_train, out_eval = jax.block_until_ready((out_train, out_eval))

    # Reference (same math as the PyTorch forward, in f32).
    weight_epsilon = params["eps_out"][:, None] * params["eps_in"][None, :]
    w_ref = params["weight_mu"] + params["weight_sigma"] * weight_epsilon
    b_ref = params["bias_mu"] + params["bias_sigma"] * params["eps_out"]
    ref_train = x @ w_ref.T + b_ref
    ref_eval = x @ params["weight_mu"].T + params["bias_mu"]

    assert out_train.shape == (B, out_features)
    assert out_eval.shape == (B, out_features)
    # bf16 weight/activation streaming with an f32 accumulator -> loosened tolerance.
    assert jnp.allclose(out_train, ref_train, atol=5e-2, rtol=5e-2)
    assert jnp.allclose(out_eval, ref_eval, atol=5e-2, rtol=5e-2)

    print("KERNEL_OK")
</pallas_src>

<mosaic_0001>
module attributes {stable_mosaic.version = 11 : i64} {
  func.func @_noisy_linear_kernel(%arg0: i32, %arg1: i32, %arg2: i32, %arg3: memref<16x128xbf16, #tpu.memory_space<vmem>>, %arg4: memref<16x128xbf16, #tpu.memory_space<vmem>>, %arg5: memref<128x128xbf16, #tpu.memory_space<vmem>>, %arg6: memref<128x128xbf16, #tpu.memory_space<vmem>>, %arg7: memref<1x128xf32, #tpu.memory_space<vmem>>, %arg8: memref<1x128xf32, #tpu.memory_space<vmem>>, %arg9: memref<16x128xf32, #tpu.memory_space<vmem>>, %arg10: memref<16x128xf32, #tpu.memory_space<vmem>>, %arg11: memref<16x128xf32, #tpu.memory_space<vmem>>) attributes {dimension_semantics = [#tpu.dimension_semantics<parallel>, #tpu.dimension_semantics<parallel>, #tpu.dimension_semantics<arbitrary>], iteration_bounds = array<i64: 1, 1, 1>, scalar_prefetch = 0 : i64, scratch_operands = 2 : i64, tpu.core_type = #tpu.core_type<tc>, window_params = [{transform_indices = @transform_0, window_bounds = array<i64: 16, 128>}, {transform_indices = @transform_1, window_bounds = array<i64: 16, 128>}, {transform_indices = @transform_2, window_bounds = array<i64: 128, 128>}, {transform_indices = @transform_3, window_bounds = array<i64: 128, 128>}, {transform_indices = @transform_4, window_bounds = array<i64: 1, 128>}, {transform_indices = @transform_5, window_bounds = array<i64: 1, 128>}, {transform_indices = @transform_6, window_bounds = array<i64: 16, 128>}]} {
    %c0_i32 = arith.constant 0 : i32
    %0 = arith.cmpi eq, %arg2, %c0_i32 : i32
    %1 = arith.extui %0 : i1 to i32
    %c0_i32_0 = arith.constant 0 : i32
    %2 = arith.cmpi ne, %1, %c0_i32_0 : i32
    scf.if %2 {
      %cst_19 = arith.constant 0.000000e+00 : f32
      %18 = vector.broadcast %cst_19 : f32 to vector<16x128xf32>
      %c0_20 = arith.constant 0 : index
      %c0_21 = arith.constant 0 : index
      %19 = vector.load %arg10[%c0_20, %c0_21] : memref<16x128xf32, #tpu.memory_space<vmem>>, vector<16x128xf32>
      tpu.vector_store %arg10[%c0_20, %c0_21], %18 {strides = array<i32>} : memref<16x128xf32, #tpu.memory_space<vmem>>, vector<16x128xf32>,
      %cst_22 = arith.constant 0.000000e+00 : f32
      %20 = vector.broadcast %cst_22 : f32 to vector<16x128xf32>
      %c0_23 = arith.constant 0 : index
      %c0_24 = arith.constant 0 : index
      %21 = vector.load %arg11[%c0_23, %c0_24] : memref<16x128xf32, #tpu.memory_space<vmem>>, vector<16x128xf32>
      tpu.vector_store %arg11[%c0_23, %c0_24], %20 {strides = array<i32>} : memref<16x128xf32, #tpu.memory_space<vmem>>, vector<16x128xf32>,
    } else {
    }
    %c0 = arith.constant 0 : index
    %c0_1 = arith.constant 0 : index
    %3 = vector.load %arg10[%c0, %c0_1] : memref<16x128xf32, #tpu.memory_space<vmem>>, vector<16x128xf32>
    %c0_2 = arith.constant 0 : index
    %c0_3 = arith.constant 0 : index
    %4 = vector.load %arg3[%c0_2, %c0_3] : memref<16x128xbf16, #tpu.memory_space<vmem>>, vector<16x128xbf16>
    %c0_4 = arith.constant 0 : index
    %c0_5 = arith.constant 0 : index
    %5 = vector.load %arg5[%c0_4, %c0_5] : memref<128x128xbf16, #tpu.memory_space<vmem>>, vector<128x128xbf16>
    %cst = arith.constant dense<0.000000e+00> : vector<16x128xf32>
    %6 = tpu.matmul %4, %5, %cst {dimension_numbers = #tpu.dot_dimension_numbers<[1], [1], [0], [0], [0, 0, 1, 0], [], []>} : vector<16x128xbf16>, vector<128x128xbf16>, vector<16x128xf32> -> vector<16x128xf32>
    %7 = arith.addf %3, %6 : vector<16x128xf32>
    %c0_6 = arith.constant 0 : index
    %c0_7 = arith.constant 0 : index
    %8 = vector.load %arg10[%c0_6, %c0_7] : memref<16x128xf32, #tpu.memory_space<vmem>>, vector<16x128xf32>
    tpu.vector_store %arg10[%c0_6, %c0_7], %7 {strides = array<i32>} : memref<16x128xf32, #tpu.memory_space<vmem>>, vector<16x128xf32>,
    %c0_8 = arith.constant 0 : index
    %c0_9 = arith.constant 0 : index
    %9 = vector.load %arg11[%c0_8, %c0_9] : memref<16x128xf32, #tpu.memory_space<vmem>>, vector<16x128xf32>
    %c0_10 = arith.constant 0 : index
    %c0_11 = arith.constant 0 : index
    %10 = vector.load %arg4[%c0_10, %c0_11] : memref<16x128xbf16, #tpu.memory_space<vmem>>, vector<16x128xbf16>
    %c0_12 = arith.constant 0 : index
    %c0_13 = arith.constant 0 : index
    %11 = vector.load %arg6[%c0_12, %c0_13] : memref<128x128xbf16, #tpu.memory_space<vmem>>, vector<128x128xbf16>
    %cst_14 = arith.constant dense<0.000000e+00> : vector<16x128xf32>
    %12 = tpu.matmul %10, %11, %cst_14 {dimension_numbers = #tpu.dot_dimension_numbers<[1], [1], [0], [0], [0, 0, 1, 0], [], []>} : vector<16x128xbf16>, vector<128x128xbf16>, vector<16x128xf32> -> vector<16x128xf32>
    %13 = arith.addf %9, %12 : vector<16x128xf32>
    %c0_15 = arith.constant 0 : index
    %c0_16 = arith.constant 0 : index
    %14 = vector.load %arg11[%c0_15, %c0_16] : memref<16x128xf32, #tpu.memory_space<vmem>>, vector<16x128xf32>
    tpu.vector_store %arg11[%c0_15, %c0_16], %13 {strides = array<i32>} : memref<16x128xf32, #tpu.memory_space<vmem>>, vector<16x128xf32>,
    %c0_i32_17 = arith.constant 0 : i32
    %15 = arith.cmpi eq, %arg2, %c0_i32_17 : i32
    %16 = arith.extui %15 : i1 to i32
    %c0_i32_18 = arith.constant 0 : i32
    %17 = arith.cmpi ne, %16, %c0_i32_18 : i32
    scf.if %17 {
      %c0_19 = arith.constant 0 : index
      %c0_20 = arith.constant 0 : index
      %18 = vector.load %arg10[%c0_19, %c0_20] : memref<16x128xf32, #tpu.memory_space<vmem>>, vector<16x128xf32>
      %c0_21 = arith.constant 0 : index
      %c0_22 = arith.constant 0 : index
      %19 = vector.load %arg11[%c0_21, %c0_22] : memref<16x128xf32, #tpu.memory_space<vmem>>, vector<16x128xf32>
      %c0_23 = arith.constant 0 : index
      %c0_24 = arith.constant 0 : index
      %20 = vector.load %arg7[%c0_23, %c0_24] : memref<1x128xf32, #tpu.memory_space<vmem>>, vector<1x128xf32>
      %21 = vector.broadcast %20 : vector<1x128xf32> to vector<16x128xf32>
      %22 = arith.mulf %19, %21 : vector<16x128xf32>
      %23 = arith.addf %18, %22 : vector<16x128xf32>
      %c0_25 = arith.constant 0 : index
      %c0_26 = arith.constant 0 : index
      %24 = vector.load %arg8[%c0_25, %c0_26] : memref<1x128xf32, #tpu.memory_space<vmem>>, vector<1x128xf32>
      %25 = vector.broadcast %24 : vector<1x128xf32> to vector<16x128xf32>
      %26 = arith.addf %23, %25 : vector<16x128xf32>
      %c0_27 = arith.constant 0 : index
      %c0_28 = arith.constant 0 : index
      %27 = vector.load %arg9[%c0_27, %c0_28] : memref<16x128xf32, #tpu.memory_space<vmem>>, vector<16x128xf32>
      tpu.vector_store %arg9[%c0_27, %c0_28], %26 {strides = array<i32>} : memref<16x128xf32, #tpu.memory_space<vmem>>, vector<16x128xf32>,
    } else {
    }
    return
  }
  func.func @transform_0(%arg0: i32, %arg1: i32, %arg2: i32) -> (i32, i32) {
    %c0_i32 = arith.constant 0 : i32
    return %arg0, %arg2 : i32, i32
  }
  func.func @transform_1(%arg0: i32, %arg1: i32, %arg2: i32) -> (i32, i32) {
    %c0_i32 = arith.constant 0 : i32
    return %arg0, %arg2 : i32, i32
  }
  func.func @transform_2(%arg0: i32, %arg1: i32, %arg2: i32) -> (i32, i32) {
    %c0_i32 = arith.constant 0 : i32
    return %arg1, %arg2 : i32, i32
  }
  func.func @transform_3(%arg0: i32, %arg1: i32, %arg2: i32) -> (i32, i32) {
    %c0_i32 = arith.constant 0 : i32
    return %arg1, %arg2 : i32, i32
  }
  func.func @transform_4(%arg0: i32, %arg1: i32, %arg2: i32) -> (i32, i32) {
    %c0_i32 = arith.constant 0 : i32
    %c0_i32_0 = arith.constant 0 : i32
    return %c0_i32, %arg1 : i32, i32
  }
  func.func @transform_5(%arg0: i32, %arg1: i32, %arg2: i32) -> (i32, i32) {
    %c0_i32 = arith.constant 0 : i32
    %c0_i32_0 = arith.constant 0 : i32
    return %c0_i32, %arg1 : i32, i32
  }
  func.func @transform_6(%arg0: i32, %arg1: i32, %arg2: i32) -> (i32, i32) {
    %c0_i32 = arith.constant 0 : i32
    return %arg0, %arg1 : i32, i32
  }
}

</mosaic_0001>

<llo_original>
// kernel: tpu_custom_call.1
$region0: #{tpu_custom_call.1}
  #allocation0 [shape = 'u32[]', space=smem, size = 0x4, offset = 0x4, fixed_abs, tag = 'smem constant byte address 0x4 - core index']
  #allocation1 [shape = 'u32[72,128]{1,0:T(1,128)}', space=vmem, size = 0x9000, scoped, tag = 'internal scratch']
  #allocation2 [shape = 'f32[16,128]{1,0:T(8,128)}', space=vmem, size = 0x2000, scoped, tag = 'scratch operand']
  #allocation3 [shape = 'f32[16,128]{1,0:T(8,128)}', space=vmem, size = 0x2000, scoped, tag = 'scratch operand']
  %s0 = inlined_call_operand.hbm [shape: bf16[16,128], index: 0, kind: input, shape index: {}]
  %s1 = inlined_call_operand.hbm [shape: bf16[16,128], index: 1, kind: input, shape index: {}]
  %s2 = inlined_call_operand.hbm [shape: bf16[128,128], index: 2, kind: input, shape index: {}]
  %s3 = inlined_call_operand.hbm [shape: bf16[128,128], index: 3, kind: input, shape index: {}]
  %s4 = inlined_call_operand.vmem [shape: f32[1,128], index: 4, kind: input, shape index: {}]
  %s5 = inlined_call_operand.vmem [shape: f32[1,128], index: 5, kind: input, shape index: {}]
  %s6 = inlined_call_operand.hbm [shape: f32[16,128], index: 6, kind: output, shape index: {}]
  %s7 = sld [smem:[#allocation0]]
  $region58: #{tpu_custom_call.1} parent=0
    _
  %s9 = ssub.s32 1, %s7
  %s10 = scalar_select 0, %s9, %s7
  $region1: #{tpu_custom_call.1} parent=0
    #allocation4 [shape = 'u8[4096]{0}', space=vmem, size = 0x1000, scoped, tag = 'input window, operand 0, single buffered']
    #allocation5 [shape = 's32[1]{0}', space=sflag, size = 0x4, scoped, tag = 'scoped memory for tpu_custom_call.1']
    #allocation6 [shape = 's32[1]{0}', space=sflag, size = 0x4, scoped, tag = 'scoped memory for tpu_custom_call.1']
    #allocation7 [shape = 'u8[4096]{0}', space=vmem, size = 0x1000, scoped, tag = 'input window, operand 1, single buffered']
    #allocation8 [shape = 's32[1]{0}', space=sflag, size = 0x4, scoped, tag = 'scoped memory for tpu_custom_call.1']
    #allocation9 [shape = 'u8[32768]{0}', space=vmem, size = 0x8000, scoped, tag = 'input window, operand 2, single buffered']
    #allocation10 [shape = 'u8[32768]{0}', space=vmem, size = 0x8000, scoped, tag = 'input window, operand 3, single buffered']
    #allocation11 [shape = 's32[1]{0}', space=sflag, size = 0x4, scoped, tag = 'scoped memory for tpu_custom_call.1']
    #allocation12 [shape = 'u8[8192]{0}', space=vmem, size = 0x2000, scoped, tag = 'output window, operand 0, single buffered']
    %11 = vsyncpa [#allocation5], 0
    %12 = vsyncpa [#allocation8], 0
    %13 = vsyncpa [#allocation11], 0
    %14 = vsyncpa [#allocation6], 0
    // Predicated region
    $region2: #{tpu_custom_call.1} parent=1 // pred_check
      _
    $region3: #{tpu_custom_call.1} parent=1 // pred_check_branch
      %16 = sbr.rel (0) target = $region5
    $region4: #{tpu_custom_call.1} parent=1 // pred_region
      %18 = vsyncadd [#allocation5], 0
      %s19 = sshll.u32 %s0, 4
      %s20 = int_to_ptr.hbm [resolvable:$true] %s19
      %s21 = sshll.u32 [#allocation4], 4
      %s22 = int_to_ptr.vmem [resolvable:$true] %s21
      %27 = dma.hbm_to_vmem [thread:$0]  %s20, 128, %s22, [#allocation5], 64, 64, 4
    $region5: #{tpu_custom_call.1} parent=1 // pred_fallthru
      _
    // Predicated region
    $region6: #{tpu_custom_call.1} parent=1 // pred_check
      _
    $region7: #{tpu_custom_call.1} parent=1 // pred_check_branch
      %29 = sbr.rel (0) target = $region9
    $region8: #{tpu_custom_call.1} parent=1 // pred_region
      %31 = vsyncadd [#allocation8], 0
      %s32 = sshll.u32 %s1, 4
      %s33 = int_to_ptr.hbm [resolvable:$true] %s32
      %s34 = sshll.u32 [#allocation7], 4
      %s35 = int_to_ptr.vmem [resolvable:$true] %s34
      %40 = dma.hbm_to_vmem [thread:$0]  %s33, 128, %s35, [#allocation8], 64, 64, 4
    $region9: #{tpu_custom_call.1} parent=1 // pred_fallthru
      _
    // Predicated region
    $region10: #{tpu_custom_call.1} parent=1 // pred_check
      _
    $region11: #{tpu_custom_call.1} parent=1 // pred_check_branch
      %42 = sbr.rel (0) target = $region13
    $region12: #{tpu_custom_call.1} parent=1 // pred_region
      %44 = vsyncadd [#allocation8], 0
      %s45 = sshll.u32 %s2, 4
      %s46 = int_to_ptr.hbm [resolvable:$true] %s45
      %s47 = sshll.u32 [#allocation9], 4
      %s48 = int_to_ptr.vmem [resolvable:$true] %s47
      %53 = dma.hbm_to_vmem [thread:$0]  %s46, 1024, %s48, [#allocation8], 64, 64, 4
    $region13: #{tpu_custom_call.1} parent=1 // pred_fallthru
      _
    // Predicated region
    $region14: #{tpu_custom_call.1} parent=1 // pred_check
      _
    $region15: #{tpu_custom_call.1} parent=1 // pred_check_branch
      %55 = sbr.rel (0) target = $region17
    $region16: #{tpu_custom_call.1} parent=1 // pred_region
      %57 = vsyncadd [#allocation11], 0
      %s58 = sshll.u32 %s3, 4
      %s59 = int_to_ptr.hbm [resolvable:$true] %s58
      %s60 = sshll.u32 [#allocation10], 4
      %s61 = int_to_ptr.vmem [resolvable:$true] %s60
      %66 = dma.hbm_to_vmem [thread:$0]  %s59, 1024, %s61, [#allocation11], 64, 64, 4
    $region17: #{tpu_custom_call.1} parent=1 // pred_fallthru
      _
    // Predicated region
    $region18: #{tpu_custom_call.1} parent=1 // pred_check
      _
    $region19: #{tpu_custom_call.1} parent=1 // pred_check_branch
      %68 = sbr.rel (0) target = $region21
    $region20: #{tpu_custom_call.1} parent=1 // pred_region
      _
    $region21: #{tpu_custom_call.1} parent=1 // pred_fallthru
      _
    // Predicated region
    $region22: #{tpu_custom_call.1} parent=1 // pred_check
      _
    $region23: #{tpu_custom_call.1} parent=1 // pred_check_branch
      %70 = sbr.rel (0) target = $region25
    $region24: #{tpu_custom_call.1} parent=1 // pred_region
      _
    $region25: #{tpu_custom_call.1} parent=1 // pred_fallthru
      _
    // Predicated region
    $region26: #{tpu_custom_call.1} parent=1 // pred_check
      _
    $region27: #{tpu_custom_call.1} parent=1 // pred_check_branch
      %72 = sbr.rel (0) target = $region29
    $region28: #{tpu_custom_call.1} parent=1 // pred_region
      %74 = dma.done [#allocation5], 128
    $region29: #{tpu_custom_call.1} parent=1 // pred_fallthru
      _
    // Predicated region
    $region30: #{tpu_custom_call.1} parent=1 // pred_check
      _
    $region31: #{tpu_custom_call.1} parent=1 // pred_check_branch
      %76 = sbr.rel (0) target = $region33
    $region32: #{tpu_custom_call.1} parent=1 // pred_region
      %78 = dma.done [#allocation8], 128
    $region33: #{tpu_custom_call.1} parent=1 // pred_fallthru
      _
    // Predicated region
    $region34: #{tpu_custom_call.1} parent=1 // pred_check
      _
    $region35: #{tpu_custom_call.1} parent=1 // pred_check_branch
      %80 = sbr.rel (0) target = $region37
    $region36: #{tpu_custom_call.1} parent=1 // pred_region
      %82 = dma.done [#allocation8], 1024
    $region37: #{tpu_custom_call.1} parent=1 // pred_fallthru
      _
    // Predicated region
    $region38: #{tpu_custom_call.1} parent=1 // pred_check
      _
    $region39: #{tpu_custom_call.1} parent=1 // pred_check_branch
      %84 = sbr.rel (0) target = $region41
    $region40: #{tpu_custom_call.1} parent=1 // pred_region
      %86 = dma.done [#allocation11], 1024
    $region41: #{tpu_custom_call.1} parent=1 // pred_fallthru
      _
    %p87 = scmp.eq.s32.totalorder 0, 0
    // Predicated region
    $region42: #{tpu_custom_call.1} parent=1 // pred_check
      %p88 = pneg %p87
    $region43: #{tpu_custom_call.1} parent=1 // pred_check_branch
      %90 = sbr.rel (%p88) target = $region45
    $region44: #{tpu_custom_call.1} parent=1 // pred_region
      %91 = vst [vmem:[#allocation2] sm:$0xff] 0.0
      %92 = vst [vmem:[#allocation2 + $0x8] sm:$0xff] 0.0
      %93 = vst [vmem:[#allocation3] sm:$0xff] 0.0
      %94 = vst [vmem:[#allocation3 + $0x8] sm:$0xff] 0.0
    $region45: #{tpu_custom_call.1} parent=1 // pred_fallthru
      _
    %v95 = vld [vmem:[#allocation2] sm:$0xff]
    %v96 = vld [vmem:[#allocation2 + $0x8] sm:$0xff]
    %v97 = vld [vmem:[#allocation4] sm:$0xf]
    %v98 = vld [vmem:[#allocation4 + $0x4] sm:$0xf]
    %v99 = vld [vmem:[#allocation9] sm:$0xf]
    %v100 = vld [vmem:[#allocation9 + $0x4] sm:$0xf]
    %v101 = vld [vmem:[#allocation9 + $0x8] sm:$0xf]
    %v102 = vld [vmem:[#allocation9 + $0xc] sm:$0xf]
    %v103 = vld [vmem:[#allocation9 + $0x10] sm:$0xf]
    %v104 = vld [vmem:[#allocation9 + $0x14] sm:$0xf]
    %v105 = vld [vmem:[#allocation9 + $0x18] sm:$0xf]
    %v106 = vld [vmem:[#allocation9 + $0x1c] sm:$0xf]
    %v107 = vld [vmem:[#allocation9 + $0x20] sm:$0xf]
    %v108 = vld [vmem:[#allocation9 + $0x24] sm:$0xf]
    %v109 = vld [vmem:[#allocation9 + $0x28] sm:$0xf]
    %v110 = vld [vmem:[#allocation9 + $0x2c] sm:$0xf]
    %v111 = vld [vmem:[#allocation9 + $0x30] sm:$0xf]
    %v112 = vld [vmem:[#allocation9 + $0x34] sm:$0xf]
    %v113 = vld [vmem:[#allocation9 + $0x38] sm:$0xf]
    %v114 = vld [vmem:[#allocation9 + $0x3c] sm:$0xf]
    %v117 = vunpack.c.l.b16 %v97
    %v118 = vunpack.c.l.b16 %v98
    %v119 = vpack.c.b16 %v118, %v117
    %v137 = vunpack.c.l.b16 %v99
    %v138 = vunpack.c.l.b16 %v100
    %v139 = vunpack.c.l.b16 %v101
    %v140 = vunpack.c.l.b16 %v102
    %v141 = vunpack.c.l.b16 %v103
    %v142 = vunpack.c.l.b16 %v104
    %v143 = vunpack.c.l.b16 %v105
    %v144 = vunpack.c.l.b16 %v106
    %v145 = vunpack.c.l.b16 %v107
    %v146 = vunpack.c.l.b16 %v108
    %v147 = vunpack.c.l.b16 %v109
    %v148 = vunpack.c.l.b16 %v110
    %v149 = vunpack.c.l.b16 %v111
    %v150 = vunpack.c.l.b16 %v112
    %v151 = vunpack.c.l.b16 %v113
    %v152 = vunpack.c.l.b16 %v114
    %v153 = vpack.c.b16 %v138, %v137
    %v154 = vpack.c.b16 %v140, %v139
    %v155 = vpack.c.b16 %v142, %v141
    %v156 = vpack.c.b16 %v144, %v143
    %v157 = vpack.c.b16 %v146, %v145
    %v158 = vpack.c.b16 %v148, %v147
    %v159 = vpack.c.b16 %v150, %v149
    %v160 = vpack.c.b16 %v152, %v151
    %169 = vmatpush.bf16.xpose.msra.mxu0 %v160
    %170 = vmatpush.bf16.xpose.msra.mxu0 %v159
    %171 = vmatpush.bf16.xpose.msra.mxu0 %v158
    %172 = vmatpush.bf16.xpose.msra.mxu0 %v157
    %173 = vmatpush.bf16.xpose.msra.mxu0 %v156
    %174 = vmatpush.bf16.xpose.msra.mxu0 %v155
    %175 = vmatpush.bf16.xpose.msra.mxu0 %v154
    %176 = vmatpush.bf16.xpose.msra.mxu0 %v153
    %177 = vmatmul.bf16.gmra.mxu0 %v119
    %v178 = vpop.f32.mrf.mxu0
    %v179 = vadd.f32 0.0, %v178
    %v180 = vpop.f32.mrf.mxu0
    %v181 = vadd.f32 0.0, %v180
    %182 = vdwg.mxu0
    %v183 = vadd.f32 %v95, %v179
    %v184 = vadd.f32 %v96, %v181
    %185 = vst [vmem:[#allocation2] sm:$0xff] %v183
    %186 = vst [vmem:[#allocation2 + $0x8] sm:$0xff] %v184
    %v187 = vld [vmem:[#allocation3] sm:$0xff]
    %v188 = vld [vmem:[#allocation3 + $0x8] sm:$0xff]
    %v189 = vld [vmem:[#allocation7] sm:$0xf]
    %v190 = vld [vmem:[#allocation7 + $0x4] sm:$0xf]
    %v191 = vld [vmem:[#allocation10] sm:$0xf]
    %v192 = vld [vmem:[#allocation10 + $0x4] sm:$0xf]
    %v193 = vld [vmem:[#allocation10 + $0x8] sm:$0xf]
    %v194 = vld [vmem:[#allocation10 + $0xc] sm:$0xf]
    %v195 = vld [vmem:[#allocation10 + $0x10] sm:$0xf]
    %v196 = vld [vmem:[#allocation10 + $0x14] sm:$0xf]
    %v197 = vld [vmem:[#allocation10 + $0x18] sm:$0xf]
    %v198 = vld [vmem:[#allocation10 + $0x1c] sm:$0xf]
    %v199 = vld [vmem:[#allocation10 + $0x20] sm:$0xf]
    %v200 = vld [vmem:[#allocation10 + $0x24] sm:$0xf]
    %v201 = vld [vmem:[#allocation10 + $0x28] sm:$0xf]
    %v202 = vld [vmem:[#allocation10 + $0x2c] sm:$0xf]
    %v203 = vld [vmem:[#allocation10 + $0x30] sm:$0xf]
    %v204 = vld [vmem:[#allocation10 + $0x34] sm:$0xf]
    %v205 = vld [vmem:[#allocation10 + $0x38] sm:$0xf]
    %v206 = vld [vmem:[#allocation10 + $0x3c] sm:$0xf]
    %v209 = vunpack.c.l.b16 %v189
    %v210 = vunpack.c.l.b16 %v190
    %v211 = vpack.c.b16 %v210, %v209
    %v229 = vunpack.c.l.b16 %v191
    %v230 = vunpack.c.l.b16 %v192
    %v231 = vunpack.c.l.b16 %v193
    %v232 = vunpack.c.l.b16 %v194
    %v233 = vunpack.c.l.b16 %v195
    %v234 = vunpack.c.l.b16 %v196
    %v235 = vunpack.c.l.b16 %v197
    %v236 = vunpack.c.l.b16 %v198
    %v237 = vunpack.c.l.b16 %v199
    %v238 = vunpack.c.l.b16 %v200
    %v239 = vunpack.c.l.b16 %v201
    %v240 = vunpack.c.l.b16 %v202
    %v241 = vunpack.c.l.b16 %v203
    %v242 = vunpack.c.l.b16 %v204
    %v243 = vunpack.c.l.b16 %v205
    %v244 = vunpack.c.l.b16 %v206
    %v245 = vpack.c.b16 %v230, %v229
    %v246 = vpack.c.b16 %v232, %v231
    %v247 = vpack.c.b16 %v234, %v233
    %v248 = vpack.c.b16 %v236, %v235
    %v249 = vpack.c.b16 %v238, %v237
    %v250 = vpack.c.b16 %v240, %v239
    %v251 = vpack.c.b16 %v242, %v241
    %v252 = vpack.c.b16 %v244, %v243
    %261 = vmatpush.bf16.xpose.msra.mxu0 %v252
    %262 = vmatpush.bf16.xpose.msra.mxu0 %v251
    %263 = vmatpush.bf16.xpose.msra.mxu0 %v250
    %264 = vmatpush.bf16.xpose.msra.mxu0 %v249
    %265 = vmatpush.bf16.xpose.msra.mxu0 %v248
    %266 = vmatpush.bf16.xpose.msra.mxu0 %v247
    %267 = vmatpush.bf16.xpose.msra.mxu0 %v246
    %268 = vmatpush.bf16.xpose.msra.mxu0 %v245
    %269 = vmatmul.bf16.gmra.mxu0 %v211
    %v270 = vpop.f32.mrf.mxu0
    %v271 = vadd.f32 0.0, %v270
    %v272 = vpop.f32.mrf.mxu0
    %v273 = vadd.f32 0.0, %v272
    %274 = vdwg.mxu0
    %v275 = vadd.f32 %v187, %v271
    %v276 = vadd.f32 %v188, %v273
    %277 = vst [vmem:[#allocation3] sm:$0xff] %v275
    %278 = vst [vmem:[#allocation3 + $0x8] sm:$0xff] %v276
    // Predicated region
    $region46: #{tpu_custom_call.1} parent=1 // pred_check
      %p279 = pneg %p87
    $region47: #{tpu_custom_call.1} parent=1 // pred_check_branch
      %281 = sbr.rel (%p279) target = $region49
    $region48: #{tpu_custom_call.1} parent=1 // pred_region
      %v282 = vld [vmem:[#allocation2] sm:$0xff]
      %v283 = vld [vmem:[#allocation2 + $0x8] sm:$0xff]
      %v284 = vld [vmem:[#allocation3] sm:$0xff]
      %v285 = vld [vmem:[#allocation3 + $0x8] sm:$0xff]
      %v286 = vld [vmem:[%s4] sm:$0x1]
      %v288 = vperm.slane %v286, 0
      %v290 = vmul.f32 %v284, %v288
      %v291 = vmul.f32 %v285, %v288
      %v292 = vadd.f32 %v282, %v290
      %v293 = vadd.f32 %v283, %v291
      %v294 = vld [vmem:[%s5] sm:$0x1]
      %v296 = vperm.slane %v294, 0
      %v298 = vadd.f32 %v292, %v296
      %v299 = vadd.f32 %v293, %v296
      %300 = vst [vmem:[#allocation12] sm:$0xff] %v298
      %301 = vst [vmem:[#allocation12 + $0x8] sm:$0xff] %v299
    $region49: #{tpu_custom_call.1} parent=1 // pred_fallthru
      _
    // Predicated region
    $region50: #{tpu_custom_call.1} parent=1 // pred_check
      _
    $region51: #{tpu_custom_call.1} parent=1 // pred_check_branch
      %303 = sbr.rel (0) target = $region53
    $region52: #{tpu_custom_call.1} parent=1 // pred_region
      %305 = vsyncadd [#allocation6], 0
      %s306 = sshll.u32 [#allocation12], 4
      %s307 = int_to_ptr.vmem [resolvable:$true] %s306
      %s308 = sshll.u32 %s6, 4
      %s309 = int_to_ptr.hbm [resolvable:$true] %s308
      %314 = dma.vmem_to_hbm [thread:$0]  %s307, 256, %s309, [#allocation6], 128, 128, 8
    $region53: #{tpu_custom_call.1} parent=1 // pred_fallthru
      _
    // Predicated region
    $region54: #{tpu_custom_call.1} parent=1 // pred_check
      _
    $region55: #{tpu_custom_call.1} parent=1 // pred_check_branch
      %316 = sbr.rel (0) target = $region57
    $region56: #{tpu_custom_call.1} parent=1 // pred_region
      %318 = dma.done [#allocation6], 256
    $region57: #{tpu_custom_call.1} parent=1 // pred_fallthru
      _
    %319 = vsyncpa [#allocation5], 1
    %320 = vsyncpa [#allocation8], 1
    %321 = vsyncpa [#allocation11], 1
    %322 = vsyncpa [#allocation6], 1

</llo_original>
